<compile_context>
chip_gen: v7x
topology: tpu7x:2x2x1
jax: 0.10.0
libtpu: 0.0.40
codegen_flags: <defaults>
</compile_context>

<pallas_src>
import functools

import jax
import jax.numpy as jnp
from jax.experimental import pallas as pl
from jax.experimental.pallas import tpu as pltpu


# --------------------------------------------------------------------------
# Pallas kernels
# --------------------------------------------------------------------------
def _gnn_layer_kernel(x_ref, bnd_ref, msg_ref, obj_ohT_ref, whT_ref, bh_ref,
                      out_ref, acc_ref, *, n, D):
    """One GNN layer, grid = (entity tiles [parallel], edge tiles [reduction]).

    x_ref      : (tile_ent, n*D)    folded layer input tile (f32)
    bnd_ref    : (tile_ent, n*D)    boundary tile (f32)
    msg_ref    : (e_tile, n*D)      per-edge DistMult messages (bf16, precomputed)
    obj_ohT_ref: (tile_ent, e_tile) bf16 transposed one-hot of edge target nodes
    whT_ref    : (2D, D)            W_h^T (stacked: first D rows hit agg, last D hit x)
    bh_ref     : (1, D)             W_h bias
    out_ref    : (tile_ent, n*D)    new node states (residual fused)
    acc_ref    : (tile_ent, n*D)    f32 scratch accumulator
    """
    k = pl.program_id(1)

    # -- init: accumulator starts at boundary (agg = scatter_sum + boundary) --
    @pl.when(k == 0)
    def _():
        acc_ref[...] = bnd_ref[...]

    # -- scatter-add of this edge tile: bf16 MXU matmul, f32 accumulation --
    acc_ref[...] += jnp.dot(obj_ohT_ref[...], msg_ref[...],
                            preferred_element_type=jnp.float32)

    # -- epilogue (last edge tile): W_h, LayerNorm, ReLU, fused residual --
    @pl.when(k == pl.num_programs(1) - 1)
    def _():
        x_tile = x_ref[...]                                 # (tile_ent, n*D)
        agg = acc_ref[...]                                  # includes boundary
        outs = []
        for q in range(n):                                  # per-query D-wide slab
            sl = slice(q * D, (q + 1) * D)
            a_q = agg[:, sl]
            x_q = x_tile[:, sl]
            # fused K=2D matmul instead of two K=D matmuls
            feat = jnp.concatenate([a_q, x_q], axis=-1)     # (tile_ent, 2D)
            h = (jnp.dot(feat, whT_ref[...],
                         preferred_element_type=jnp.float32) + bh_ref[...])
            mean = jnp.mean(h, axis=-1, keepdims=True)
            var = jnp.mean((h - mean) ** 2, axis=-1, keepdims=True)
            hn = (h - mean) * jax.lax.rsqrt(var + 1e-5)     # LayerNorm, no affine
            outs.append(jnp.maximum(hn, 0.0) + x_q)         # relu + residual
        # single lane-dense store of the whole output block
        out_ref[...] = jnp.concatenate(outs, axis=-1)


def _score_kernel(x_ref, qb1_ref, w1xT_ref, w2_ref, b2_ref, out_ref, *, n, D):
    """score(): per-query relu(x@W1x^T + (q@W1q^T+b1)) . w2 + b2, grid over entity tiles.

    x_ref   : (tile_ent, n*D) folded node states
    qb1_ref : (n, 2D)         query @ W1q^T + b1 (precomputed, tiny)
    w1xT_ref: (D, 2D)         hidden half of W1, transposed
    w2_ref  : (1, 2D)         second MLP layer weights (row)
    b2_ref  : (1, 1)          second MLP layer bias
    out_ref : (tile_ent, n)   scores (transposed to (n, n_ent) outside)
    """
    cols = []
    for q in range(n):
        sl = slice(q * D, (q + 1) * D)
        h1 = (jnp.dot(x_ref[:, sl], w1xT_ref[...],
                      preferred_element_type=jnp.float32)
              + qb1_ref[q:q + 1, :])
        h1 = jnp.maximum(h1, 0.0)
        # width-1 output: VPU multiply + XLU reduce instead of N=1 MXU matmul
        cols.append(jnp.sum(h1 * w2_ref[...], axis=-1, keepdims=True) + b2_ref[...])
    out_ref[...] = jnp.concatenate(cols, axis=-1)           # single block store


# --------------------------------------------------------------------------
# Pallas wrappers
# --------------------------------------------------------------------------
_VMEM_LIMIT = 48 * 1024 * 1024   # safe on v7x (64 MiB phys), generous on v5e/v6e


def gnn_layer_pallas(x_f, bnd_f, msg_bf, obj_ohT, whT, bh, *, n, D,
                     tile_ent, e_tile):
    n_ent, nD = x_f.shape
    E_pad = msg_bf.shape[0]
    assert n_ent % tile_ent == 0 and (tile_ent % 8 == 0 or tile_ent == n_ent)
    assert E_pad % e_tile == 0 and (e_tile % 128 == 0 or e_tile == E_pad)

    kernel = functools.partial(_gnn_layer_kernel, n=n, D=D)
    return pl.pallas_call(
        kernel,
        out_shape=jax.ShapeDtypeStruct((n_ent, nD), jnp.float32),
        grid=(n_ent // tile_ent, E_pad // e_tile),
        in_specs=[
            pl.BlockSpec((tile_ent, nD), lambda i, k: (i, 0)),      # layer input tile
            pl.BlockSpec((tile_ent, nD), lambda i, k: (i, 0)),      # boundary tile
            pl.BlockSpec((e_tile, nD), lambda i, k: (k, 0)),        # messages (bf16)
            pl.BlockSpec((tile_ent, e_tile), lambda i, k: (i, k)),  # obj one-hot^T
            pl.BlockSpec((2 * D, D), lambda i, k: (0, 0)),          # W_h^T
            pl.BlockSpec((1, D), lambda i, k: (0, 0)),              # W_h bias
        ],
        out_specs=pl.BlockSpec((tile_ent, nD), lambda i, k: (i, 0)),
        scratch_shapes=[pltpu.VMEM((tile_ent, nD), jnp.float32)],
        compiler_params=pltpu.CompilerParams(
            dimension_semantics=("parallel", "arbitrary"),
            vmem_limit_bytes=_VMEM_LIMIT),
    )(x_f, bnd_f, msg_bf, obj_ohT, whT, bh)


def score_pallas(x_f, qb1, w1xT, w2_row, b2, *, n, D, tile_ent):
    n_ent, nD = x_f.shape
    twoD = qb1.shape[1]
    kernel = functools.partial(_score_kernel, n=n, D=D)
    out = pl.pallas_call(
        kernel,
        out_shape=jax.ShapeDtypeStruct((n_ent, n), jnp.float32),
        grid=(n_ent // tile_ent,),
        in_specs=[
            pl.BlockSpec((tile_ent, nD), lambda i: (i, 0)),
            pl.BlockSpec((n, twoD), lambda i: (0, 0)),
            pl.BlockSpec((D, twoD), lambda i: (0, 0)),
            pl.BlockSpec((1, twoD), lambda i: (0, 0)),
            pl.BlockSpec((1, 1), lambda i: (0, 0)),
        ],
        out_specs=pl.BlockSpec((tile_ent, n), lambda i: (i, 0)),
        compiler_params=pltpu.CompilerParams(
            dimension_semantics=("parallel",),
            vmem_limit_bytes=_VMEM_LIMIT),
    )(x_f, qb1, w1xT, w2_row, b2)
    return out.T                                            # (n, n_ent), tiny


# --------------------------------------------------------------------------
# GNNModel forward (glue in plain JAX, hot path in Pallas)
# --------------------------------------------------------------------------
def _pick_tile_ent(n_ent):
    # prefer >=2 entity tiles so the 'parallel' axis can shard across cores
    for t in (256, 128, 64, 32, 16, 8):
        if n_ent % t == 0 and n_ent // t >= 2:
            return t
    return n_ent


def gnn_model_forward(params, triples, edge_data, n_ent, *, e_tile=512,
                      tile_ent=None):
    n_rel = params["n_rel"]
    n_layer = params["n_layer"]
    D = params["hidden_dim"]
    R2 = 2 * n_rel + 1

    n = triples.shape[0]
    nD = n * D
    if tile_ent is None:
        tile_ent = _pick_tile_ent(n_ent)

    q_sub, q_rel = triples[:, 0], triples[:, 1]

    # mode == 'test' -> filter_mask all True -> filter_data == edge_data.
    sub, rel, obj = edge_data[:, 0], edge_data[:, 1], edge_data[:, 2]

    # pad the edge list to a multiple of e_tile; padded edges get obj=-1 so
    # their one-hot scatter column is all zeros (no contribution); sub/rel are
    # padded with 0 (valid indices) so the XLA gathers stay in-bounds.
    E = sub.shape[0]
    e_tile = max(128, (e_tile // 128) * 128)
    E_pad = ((E + e_tile - 1) // e_tile) * e_tile
    pad = E_pad - E
    sub_p = jnp.concatenate([sub, jnp.zeros((pad,), sub.dtype)])
    rel_p = jnp.concatenate([rel, jnp.zeros((pad,), rel.dtype)])
    obj_p = jnp.concatenate([obj, -jnp.ones((pad,), obj.dtype)])

    # only the scatter keeps a one-hot operand (bf16: exactly 0/1 -> lossless)
    obj_ohT = jax.nn.one_hot(obj_p, n_ent, dtype=jnp.bfloat16).T    # (n_ent, E_pad)

    # query = rela_embed(q_rel); boundary folded to (n_ent, n*D)
    query = params["rela_embed"][q_rel]                             # (n, D)
    boundary_f = jnp.zeros((n_ent, n, D), jnp.float32)
    boundary_f = boundary_f.at[q_sub, jnp.arange(n)].set(query).reshape(n_ent, nD)

    layer_input = boundary_f                                        # (n_ent, n*D)
    for i in range(n_layer):
        lp = params["layers"][i]
        # relation_linear (tiny, stays in XLA)
        relation = (query @ lp["rel_lin_w"].T + lp["rel_lin_b"]).reshape(n, R2, D)
        relation_f = jnp.transpose(relation, (1, 0, 2)).reshape(R2, nD)
        # true index gathers (XLA) + hoisted bf16 cast: message computed ONCE
        # per layer (not per entity tile) -> only the scatter remains in-kernel.
        input_j = jnp.take(layer_input, sub_p, axis=0)              # (E_pad, n*D)
        relation_j = jnp.take(relation_f, rel_p, axis=0)            # (E_pad, n*D)
        msg_bf = (input_j * relation_j).astype(jnp.bfloat16)        # DistMult
        layer_input = gnn_layer_pallas(
            layer_input, boundary_f, msg_bf, obj_ohT,
            lp["wh_w"].T, lp["wh_b"][None, :],
            n=n, D=D, tile_ent=tile_ent, e_tile=e_tile)

    # score(layer_input, node_query):  MLP(2D -> 2D -> 1), query half hoisted
    mlp = params["mlp"]
    w1 = mlp["w1"]                          # (2D, 2D)
    w1xT = w1[:, :D].T                      # (D, 2D)   hidden half
    qb1 = query @ w1[:, D:].T + mlp["b1"]   # (n, 2D)   query half + bias
    w2_row = mlp["w2"]                      # (1, 2D)
    b2 = mlp["b2"].reshape(1, 1)
    scores = score_pallas(layer_input, qb1, w1xT, w2_row, b2,
                          n=n, D=D, tile_ent=tile_ent)
    return scores                           # (n, n_ent)


# --------------------------------------------------------------------------
# Pure-JAX f32 reference (for numerical verification)
# --------------------------------------------------------------------------
def reference_forward(params, triples, edge_data, n_ent):
    n_rel = params["n_rel"]
    D = params["hidden_dim"]
    R2 = 2 * n_rel + 1
    n = triples.shape[0]
    q_sub, q_rel = triples[:, 0], triples[:, 1]
    sub, rel, obj = edge_data[:, 0], edge_data[:, 1], edge_data[:, 2]

    query = params["rela_embed"][q_rel]
    boundary = jnp.zeros((n, n_ent, D), jnp.float32).at[jnp.arange(n), q_sub].set(query)
    layer_input = boundary
    for i in range(params["n_layer"]):
        lp = params["layers"][i]
        relation = (query @ lp["rel_lin_w"].T + lp["rel_lin_b"]).reshape(n, R2, D)
        input_j = layer_input[:, sub, :]
        relation_j = relation[:, rel, :]
        message = input_j * relation_j
        agg = jnp.zeros((n, n_ent, D), jnp.float32).at[:, obj, :].add(message)
        agg = agg + boundary
        feat = jnp.concatenate([agg, layer_input], axis=-1)
        h = feat @ lp["wh_w"].T + lp["wh_b"]
        mean = h.mean(-1, keepdims=True)
        var = ((h - mean) ** 2).mean(-1, keepdims=True)
        hidden = jnp.maximum((h - mean) / jnp.sqrt(var + 1e-5), 0.0)
        layer_input = hidden + layer_input

    node_query = jnp.broadcast_to(query[:, None, :], (n, n_ent, D))
    feat = jnp.concatenate([layer_input, node_query], axis=-1)
    mlp = params["mlp"]
    h1 = jnp.maximum(feat @ mlp["w1"].T + mlp["b1"], 0.0)
    score = h1 @ mlp["w2"].T + mlp["b2"]
    return score[..., 0]


# --------------------------------------------------------------------------
# Deterministic parameter init
# --------------------------------------------------------------------------
def init_params(key, n_rel, hidden_dim, n_layer):
    D = hidden_dim
    R2 = 2 * n_rel + 1
    keys = jax.random.split(key, 4 + 4 * n_layer)
    k = iter(keys)
    params = {
        "n_rel": n_rel,
        "hidden_dim": D,
        "n_layer": n_layer,
        "rela_embed": 0.1 * jax.random.normal(next(k), (2 * n_rel + 2, D), jnp.float32),
        "layers": [],
        "mlp": {
            "w1": 0.1 * jax.random.normal(next(k), (2 * D, 2 * D), jnp.float32),
            "b1": 0.01 * jax.random.normal(next(k), (2 * D,), jnp.float32),
            "w2": 0.1 * jax.random.normal(next(k), (1, 2 * D), jnp.float32),
            "b2": jnp.zeros((1,), jnp.float32),
        },
    }
    for _ in range(n_layer):
        params["layers"].append({
            "rel_lin_w": 0.1 * jax.random.normal(next(k), (R2 * D, D), jnp.float32),
            "rel_lin_b": 0.01 * jax.random.normal(next(k), (R2 * D,), jnp.float32),
            "wh_w": 0.1 * jax.random.normal(next(k), (D, 2 * D), jnp.float32),
            "wh_b": 0.01 * jax.random.normal(next(k), (D,), jnp.float32),
        })
    return params


# --------------------------------------------------------------------------
if __name__ == "__main__":
    # Small synthetic problem; E > e_tile so the edge-reduction grid axis takes
    # multiple accumulation steps, and n_ent/tile_ent >= 2 so the entity axis
    # has multiple parallel tiles.
    n = 2            # batch of query triples
    n_ent = 64       # entities
    n_rel = 3        # relations  -> 2*n_rel+1 = 7 relation slots per query
    D = 32           # hidden_dim
    n_layer = 2
    E = 200          # KG edges (padded to 256, edge tile = 128 -> 2 steps)

    key = jax.random.PRNGKey(0)
    kp, k1, k2, k3, k4, k5, k6 = jax.random.split(key, 7)
    params = init_params(kp, n_rel, D, n_layer)

    # triples: (sub, rel, obj)
    triples = jnp.stack([
        jax.random.randint(k1, (n,), 0, n_ent),
        jax.random.randint(k2, (n,), 0, n_rel),
        jax.random.randint(k3, (n,), 0, n_ent),
    ], axis=1).astype(jnp.int32)

    # KG edge list: (sub, rel, obj) with relation ids in [0, 2*n_rel+1)
    edge_data = jnp.stack([
        jax.random.randint(k4, (E,), 0, n_ent),
        jax.random.randint(k5, (E,), 0, 2 * n_rel + 1),
        jax.random.randint(k6, (E,), 0, n_ent),
    ], axis=1).astype(jnp.int32)

    scores = gnn_model_forward(params, triples, edge_data, n_ent, e_tile=128)
    scores = jax.block_until_ready(scores)

    ref = jax.block_until_ready(reference_forward(params, triples, edge_data, n_ent))
    assert scores.shape == (n, n_ent), scores.shape
    # only the per-edge messages are rounded to bf16 (scatter accumulates in
    # f32); tolerance kept conservatively loose.
    max_err = float(jnp.max(jnp.abs(scores - ref)))
    assert jnp.allclose(scores, ref, rtol=5e-2, atol=5e-2), max_err

    print("KERNEL_OK")
</pallas_src>

<mosaic_0001>
module attributes {stable_mosaic.version = 11 : i64} {
  func.func @_gnn_layer_kernel(%arg0: i32, %arg1: i32, %arg2: memref<32x64xf32, #tpu.memory_space<vmem>>, %arg3: memref<32x64xf32, #tpu.memory_space<vmem>>, %arg4: memref<128x64xbf16, #tpu.memory_space<vmem>>, %arg5: memref<32x128xbf16, #tpu.memory_space<vmem>>, %arg6: memref<64x32xf32, #tpu.memory_space<vmem>>, %arg7: memref<1x32xf32, #tpu.memory_space<vmem>>, %arg8: memref<32x64xf32, #tpu.memory_space<vmem>>, %arg9: memref<32x64xf32, #tpu.memory_space<vmem>>) attributes {dimension_semantics = [#tpu.dimension_semantics<parallel>, #tpu.dimension_semantics<arbitrary>], iteration_bounds = array<i64: 2, 2>, scalar_prefetch = 0 : i64, scratch_operands = 1 : i64, tpu.core_type = #tpu.core_type<tc>, window_params = [{transform_indices = @transform_0, window_bounds = array<i64: 32, 64>}, {transform_indices = @transform_1, window_bounds = array<i64: 32, 64>}, {transform_indices = @transform_2, window_bounds = array<i64: 128, 64>}, {transform_indices = @transform_3, window_bounds = array<i64: 32, 128>}, {pipeline_mode = #tpu.pipeline_mode<synchronous>, transform_indices = @transform_4, window_bounds = array<i64: 64, 32>}, {pipeline_mode = #tpu.pipeline_mode<synchronous>, transform_indices = @transform_5, window_bounds = array<i64: 1, 32>}, {transform_indices = @transform_6, window_bounds = array<i64: 32, 64>}]} {
    %c0_i32 = arith.constant 0 : i32
    %0 = arith.cmpi eq, %arg1, %c0_i32 : i32
    %1 = arith.extui %0 : i1 to i32
    %c0_i32_0 = arith.constant 0 : i32
    %2 = arith.cmpi ne, %1, %c0_i32_0 : i32
    scf.if %2 {
      %c0_9 = arith.constant 0 : index
      %c0_10 = arith.constant 0 : index
      %12 = vector.load %arg3[%c0_9, %c0_10] : memref<32x64xf32, #tpu.memory_space<vmem>>, vector<32x64xf32>
      %c0_11 = arith.constant 0 : index
      %c0_12 = arith.constant 0 : index
      %13 = vector.load %arg9[%c0_11, %c0_12] : memref<32x64xf32, #tpu.memory_space<vmem>>, vector<32x64xf32>
      tpu.vector_store %arg9[%c0_11, %c0_12], %12 {strides = array<i32>} : memref<32x64xf32, #tpu.memory_space<vmem>>, vector<32x64xf32>,
    } else {
    }
    %c0 = arith.constant 0 : index
    %c0_1 = arith.constant 0 : index
    %3 = vector.load %arg9[%c0, %c0_1] : memref<32x64xf32, #tpu.memory_space<vmem>>, vector<32x64xf32>
    %c0_2 = arith.constant 0 : index
    %c0_3 = arith.constant 0 : index
    %4 = vector.load %arg5[%c0_2, %c0_3] : memref<32x128xbf16, #tpu.memory_space<vmem>>, vector<32x128xbf16>
    %c0_4 = arith.constant 0 : index
    %c0_5 = arith.constant 0 : index
    %5 = vector.load %arg4[%c0_4, %c0_5] : memref<128x64xbf16, #tpu.memory_space<vmem>>, vector<128x64xbf16>
    %cst = arith.constant dense<0.000000e+00> : vector<32x64xf32>
    %6 = tpu.matmul %4, %5, %cst {dimension_numbers = #tpu.dot_dimension_numbers<[1], [0], [0], [1], [0, 0, 1, 1], [], []>} : vector<32x128xbf16>, vector<128x64xbf16>, vector<32x64xf32> -> vector<32x64xf32>
    %7 = arith.addf %3, %6 : vector<32x64xf32>
    %c0_6 = arith.constant 0 : index
    %c0_7 = arith.constant 0 : index
    %8 = vector.load %arg9[%c0_6, %c0_7] : memref<32x64xf32, #tpu.memory_space<vmem>>, vector<32x64xf32>
    tpu.vector_store %arg9[%c0_6, %c0_7], %7 {strides = array<i32>} : memref<32x64xf32, #tpu.memory_space<vmem>>, vector<32x64xf32>,
    %c1_i32 = arith.constant 1 : i32
    %9 = arith.cmpi eq, %arg1, %c1_i32 : i32
    %10 = arith.extui %9 : i1 to i32
    %c0_i32_8 = arith.constant 0 : i32
    %11 = arith.cmpi ne, %10, %c0_i32_8 : i32
    scf.if %11 {
      %c0_9 = arith.constant 0 : index
      %c0_10 = arith.constant 0 : index
      %12 = vector.load %arg2[%c0_9, %c0_10] : memref<32x64xf32, #tpu.memory_space<vmem>>, vector<32x64xf32>
      %c0_11 = arith.constant 0 : index
      %c0_12 = arith.constant 0 : index
      %13 = vector.load %arg9[%c0_11, %c0_12] : memref<32x64xf32, #tpu.memory_space<vmem>>, vector<32x64xf32>
      %14 = vector.extract_strided_slice %13 {offsets = [0, 0], sizes = [32, 32], strides = [1, 1]} : vector<32x64xf32> to vector<32x32xf32>
      %15 = vector.extract_strided_slice %12 {offsets = [0, 0], sizes = [32, 32], strides = [1, 1]} : vector<32x64xf32> to vector<32x32xf32>
      %16 = tpu.concatenate %14, %15 in 1 : vector<32x32xf32>, vector<32x32xf32> -> vector<32x64xf32>
      %c0_13 = arith.constant 0 : index
      %c0_14 = arith.constant 0 : index
      %17 = vector.load %arg6[%c0_13, %c0_14] : memref<64x32xf32, #tpu.memory_space<vmem>>, vector<64x32xf32>
      %cst_15 = arith.constant dense<0.000000e+00> : vector<32x32xf32>
      %18 = tpu.matmul %16, %17, %cst_15 {dimension_numbers = #tpu.dot_dimension_numbers<[1], [0], [0], [1], [0, 0, 1, 1], [], []>} : vector<32x64xf32>, vector<64x32xf32>, vector<32x32xf32> -> vector<32x32xf32>
      %c0_16 = arith.constant 0 : index
      %c0_17 = arith.constant 0 : index
      %19 = vector.load %arg7[%c0_16, %c0_17] : memref<1x32xf32, #tpu.memory_space<vmem>>, vector<1x32xf32>
      %20 = vector.broadcast %19 : vector<1x32xf32> to vector<32x32xf32>
      %21 = arith.addf %18, %20 : vector<32x32xf32>
      %cst_18 = arith.constant dense<0.000000e+00> : vector<32xf32>
      %22 = vector.multi_reduction <add>, %21, %cst_18 [1] : vector<32x32xf32> to vector<32xf32>
      %23 = vector.shape_cast %22 : vector<32xf32> to vector<32x1xf32>
      %cst_19 = arith.constant 3.200000e+01 : f32
      %24 = vector.broadcast %cst_19 : f32 to vector<32x1xf32>
      %25 = arith.divf %23, %24 : vector<32x1xf32>
      %26 = vector.broadcast %25 : vector<32x1xf32> to vector<32x32xf32>
      %27 = arith.subf %21, %26 : vector<32x32xf32>
      %28 = arith.mulf %27, %27 : vector<32x32xf32>
      %cst_20 = arith.constant dense<0.000000e+00> : vector<32xf32>
      %29 = vector.multi_reduction <add>, %28, %cst_20 [1] : vector<32x32xf32> to vector<32xf32>
      %30 = vector.shape_cast %29 : vector<32xf32> to vector<32x1xf32>
      %cst_21 = arith.constant 3.200000e+01 : f32
      %31 = vector.broadcast %cst_21 : f32 to vector<32x1xf32>
      %32 = arith.divf %30, %31 : vector<32x1xf32>
      %33 = vector.broadcast %25 : vector<32x1xf32> to vector<32x32xf32>
      %34 = arith.subf %21, %33 : vector<32x32xf32>
      %cst_22 = arith.constant 9.99999974E-6 : f32
      %35 = vector.broadcast %cst_22 : f32 to vector<32x1xf32>
      %36 = arith.addf %32, %35 : vector<32x1xf32>
      %37 = math.rsqrt %36 : vector<32x1xf32>
      %38 = vector.broadcast %37 : vector<32x1xf32> to vector<32x32xf32>
      %39 = arith.mulf %34, %38 : vector<32x32xf32>
      %cst_23 = arith.constant 0.000000e+00 : f32
      %40 = vector.broadcast %cst_23 : f32 to vector<32x32xf32>
      %41 = arith.maximumf %39, %40 : vector<32x32xf32>
      %42 = arith.addf %41, %15 : vector<32x32xf32>
      %43 = vector.extract_strided_slice %13 {offsets = [0, 32], sizes = [32, 32], strides = [1, 1]} : vector<32x64xf32> to vector<32x32xf32>
      %44 = vector.extract_strided_slice %12 {offsets = [0, 32], sizes = [32, 32], strides = [1, 1]} : vector<32x64xf32> to vector<32x32xf32>
      %45 = tpu.concatenate %43, %44 in 1 : vector<32x32xf32>, vector<32x32xf32> -> vector<32x64xf32>
      %c0_24 = arith.constant 0 : index
      %c0_25 = arith.constant 0 : index
      %46 = vector.load %arg6[%c0_24, %c0_25] : memref<64x32xf32, #tpu.memory_space<vmem>>, vector<64x32xf32>
      %cst_26 = arith.constant dense<0.000000e+00> : vector<32x32xf32>
      %47 = tpu.matmul %45, %46, %cst_26 {dimension_numbers = #tpu.dot_dimension_numbers<[1], [0], [0], [1], [0, 0, 1, 1], [], []>} : vector<32x64xf32>, vector<64x32xf32>, vector<32x32xf32> -> vector<32x32xf32>
      %c0_27 = arith.constant 0 : index
      %c0_28 = arith.constant 0 : index
      %48 = vector.load %arg7[%c0_27, %c0_28] : memref<1x32xf32, #tpu.memory_space<vmem>>, vector<1x32xf32>
      %49 = vector.broadcast %48 : vector<1x32xf32> to vector<32x32xf32>
      %50 = arith.addf %47, %49 : vector<32x32xf32>
      %cst_29 = arith.constant dense<0.000000e+00> : vector<32xf32>
      %51 = vector.multi_reduction <add>, %50, %cst_29 [1] : vector<32x32xf32> to vector<32xf32>
      %52 = vector.shape_cast %51 : vector<32xf32> to vector<32x1xf32>
      %cst_30 = arith.constant 3.200000e+01 : f32
      %53 = vector.broadcast %cst_30 : f32 to vector<32x1xf32>
      %54 = arith.divf %52, %53 : vector<32x1xf32>
      %55 = vector.broadcast %54 : vector<32x1xf32> to vector<32x32xf32>
      %56 = arith.subf %50, %55 : vector<32x32xf32>
      %57 = arith.mulf %56, %56 : vector<32x32xf32>
      %cst_31 = arith.constant dense<0.000000e+00> : vector<32xf32>
      %58 = vector.multi_reduction <add>, %57, %cst_31 [1] : vector<32x32xf32> to vector<32xf32>
      %59 = vector.shape_cast %58 : vector<32xf32> to vector<32x1xf32>
      %cst_32 = arith.constant 3.200000e+01 : f32
      %60 = vector.broadcast %cst_32 : f32 to vector<32x1xf32>
      %61 = arith.divf %59, %60 : vector<32x1xf32>
      %62 = vector.broadcast %54 : vector<32x1xf32> to vector<32x32xf32>
      %63 = arith.subf %50, %62 : vector<32x32xf32>
      %cst_33 = arith.constant 9.99999974E-6 : f32
      %64 = vector.broadcast %cst_33 : f32 to vector<32x1xf32>
      %65 = arith.addf %61, %64 : vector<32x1xf32>
      %66 = math.rsqrt %65 : vector<32x1xf32>
      %67 = vector.broadcast %66 : vector<32x1xf32> to vector<32x32xf32>
      %68 = arith.mulf %63, %67 : vector<32x32xf32>
      %cst_34 = arith.constant 0.000000e+00 : f32
      %69 = vector.broadcast %cst_34 : f32 to vector<32x32xf32>
      %70 = arith.maximumf %68, %69 : vector<32x32xf32>
      %71 = arith.addf %70, %44 : vector<32x32xf32>
      %72 = tpu.concatenate %42, %71 in 1 : vector<32x32xf32>, vector<32x32xf32> -> vector<32x64xf32>
      %c0_35 = arith.constant 0 : index
      %c0_36 = arith.constant 0 : index
      %73 = vector.load %arg8[%c0_35, %c0_36] : memref<32x64xf32, #tpu.memory_space<vmem>>, vector<32x64xf32>
      tpu.vector_store %arg8[%c0_35, %c0_36], %72 {strides = array<i32>} : memref<32x64xf32, #tpu.memory_space<vmem>>, vector<32x64xf32>,
    } else {
    }
    return
  }
  func.func @transform_0(%arg0: i32, %arg1: i32) -> (i32, i32) {
    %c0_i32 = arith.constant 0 : i32
    %c0_i32_0 = arith.constant 0 : i32
    return %arg0, %c0_i32 : i32, i32
  }
  func.func @transform_1(%arg0: i32, %arg1: i32) -> (i32, i32) {
    %c0_i32 = arith.constant 0 : i32
    %c0_i32_0 = arith.constant 0 : i32
    return %arg0, %c0_i32 : i32, i32
  }
  func.func @transform_2(%arg0: i32, %arg1: i32) -> (i32, i32) {
    %c0_i32 = arith.constant 0 : i32
    %c0_i32_0 = arith.constant 0 : i32
    return %arg1, %c0_i32 : i32, i32
  }
  func.func @transform_3(%arg0: i32, %arg1: i32) -> (i32, i32) {
    %c0_i32 = arith.constant 0 : i32
    return %arg0, %arg1 : i32, i32
  }
  func.func @transform_4(%arg0: i32, %arg1: i32) -> (i32, i32) {
    %c0_i32 = arith.constant 0 : i32
    %c0_i32_0 = arith.constant 0 : i32
    %c0_i32_1 = arith.constant 0 : i32
    return %c0_i32, %c0_i32_0 : i32, i32
  }
  func.func @transform_5(%arg0: i32, %arg1: i32) -> (i32, i32) {
    %c0_i32 = arith.constant 0 : i32
    %c0_i32_0 = arith.constant 0 : i32
    %c0_i32_1 = arith.constant 0 : i32
    return %c0_i32, %c0_i32_0 : i32, i32
  }
  func.func @transform_6(%arg0: i32, %arg1: i32) -> (i32, i32) {
    %c0_i32 = arith.constant 0 : i32
    %c0_i32_0 = arith.constant 0 : i32
    return %arg0, %c0_i32 : i32, i32
  }
}

</mosaic_0001>

<llo_original>
// kernel: tpu_custom_call.1
$region0: #{tpu_custom_call.1}
  #allocation0 [shape = 'u32[]', space=smem, size = 0x4, offset = 0x4, fixed_abs, tag = 'smem constant byte address 0x4 - core index']
  #allocation1 [shape = 'u32[144,128]{1,0:T(1,128)}', space=vmem, size = 0x12000, scoped, tag = 'internal scratch']
  #allocation2 [shape = 'f32[32,64]{1,0:T(8,128)}', space=vmem, size = 0x4000, scoped, tag = 'scratch operand']
  %s0 = inlined_call_operand.vmem [shape: f32[64,64], index: 0, kind: input, shape index: {}]
  %s1 = inlined_call_operand.vmem [shape: f32[64,64], index: 1, kind: input, shape index: {}]
  %s2 = inlined_call_operand.vmem [shape: bf16[256,64], index: 2, kind: input, shape index: {}]
  %s3 = inlined_call_operand.vmem [shape: bf16[64,256], index: 3, kind: input, shape index: {}]
  %s4 = inlined_call_operand.vmem [shape: f32[64,32], index: 4, kind: input, shape index: {}]
  %s5 = inlined_call_operand.vmem [shape: f32[1,32], index: 5, kind: input, shape index: {}]
  %s6 = inlined_call_operand.hbm [shape: f32[64,64], index: 6, kind: output, shape index: {}]
  %s7 = sld [smem:[#allocation0]]
  $region106: #{tpu_custom_call.1} parent=0
    _
  %s9 = ssub.s32 1, %s7
  %s10 = scalar_select 0, %s9, %s7
  $region1: #{tpu_custom_call.1} parent=0
    #allocation3 [shape = 'u8[16384]{0}', space=vmem, size = 0x4000, scoped, tag = 'input window, operand 3']
    #allocation4 [shape = 'u8[32768]{0}', space=vmem, size = 0x8000, scoped, tag = 'output window, operand 0']
    #allocation5 [shape = 's32[2]{0}', space=sflag, size = 0x8, scoped, tag = 'scoped memory for tpu_custom_call.1']
    %11 = vsyncpa [#allocation5], 0
    %s12 = scalar_lea.sflag [#allocation5], 1
    %13 = vsyncpa %s12, 0
    loop: start=0, step=1, limit=6
    $region2: #{tpu_custom_call.1} parent=1 // loop_pre_header
      _
    $region3: #{tpu_custom_call.1} parent=1 // loop_header
      %s15 = sphi 0, %s19
      %p16 = scmp.ge.s32.totalorder %s15, 6
      %s22 = sphi 0, %s34
      %s23 = sphi 0, %s30
      %s24 = sphi 0, %s22
      %s25 = sphi 0, %s23
      %s26 = sphi 0, %s24
      %s27 = sphi 0, %s25
      %s37 = sphi 0, %s39
      %s40 = sphi 0, %s37
      %s41 = sphi 0, %s40
      %s57 = sphi 0, %s41
      %s63 = sphi 0, %s65
      %s66 = sphi 0, %s63
      %s67 = sphi 0, %s66
      %s83 = sphi 0, %s67
      %s89 = sphi 0, %s91
      %s92 = sphi 0, %s89
      %s93 = sphi 0, %s92
      %s109 = sphi 0, %s93
      %s117 = sphi 0, %s119
      %s120 = sphi 0, %s117
      %s121 = sphi 0, %s120
      %s137 = sphi 0, %s121
      %s141 = sphi 0, %s141
      %s143 = sphi 0, %s141
      %s144 = sphi 0, %s143
      %s158 = sphi 0, %s144
      %s162 = sphi 0, %s162
      %s164 = sphi 0, %s162
      %s165 = sphi 0, %s164
      %s179 = sphi 0, %s165
      %s185 = sphi 0, %s187
      %s188 = sphi 0, %s185
      %s189 = sphi 0, %s188
      %s205 = sphi 0, %s189
    $region4: #{tpu_custom_call.1} parent=1 // loop_header_branch
      %18 = sbr.rel (%p16) target = $region8
    $region5: #{tpu_custom_call.1} parent=1 // loop_body
      %s20 = ssub.s32 %s15, 1
      %s21 = ssub.s32 %s15, 2
      %s28 = sadd.s32 1, %s23
      %p29 = scmp.ge.s32.totalorder %s28, 2
      %s30 = scalar_select %p29, 0, %s28
      %s31 = sadd.s32 1, %s22
      %s32 = scalar_select %p29, %s31, %s22
      %p33 = scmp.ge.s32.totalorder %s32, 2
      %s34 = scalar_select %p33, 0, %s32
      %s35 = ssub.s32 %s22, %s34
      %p36 = scmp.eq.s32.totalorder %s35, 0
      %s38 = sadd.s32 %s37, 1
      %s39 = scalar_select %p36, %s37, %s38
      %p42 = pneg %p36
      %p43 = scmp.eq.s32.totalorder %s15, 3
      %p44 = por %p42, %p43
      %p45 = scmp.ne.s32.totalorder %s37, %s40
      %p46 = scmp.eq.s32.totalorder %s15, 0
      %p47 = por %p45, %p46
      %p48 = scmp.ne.s32.totalorder %s37, %s40
      %p49 = scmp.eq.s32.totalorder %s20, 3
      %p50 = por %p48, %p49
      %p51 = scmp.ne.s32.totalorder %s40, %s41
      %p52 = scmp.eq.s32.totalorder %s20, 0
      %p53 = por %p51, %p52
      %p54 = scmp.ne.s32.totalorder %s40, %s41
      %p55 = scmp.eq.s32.totalorder %s21, 3
      %p56 = por %p54, %p55
      %p58 = scmp.ne.s32.totalorder %s41, %s57
      %p59 = scmp.eq.s32.totalorder %s21, 0
      %p60 = por %p58, %p59
      %s61 = ssub.s32 %s22, %s34
      %p62 = scmp.eq.s32.totalorder %s61, 0
      %s64 = sadd.s32 %s63, 1
      %s65 = scalar_select %p62, %s63, %s64
      %p68 = pneg %p62
      %p69 = scmp.eq.s32.totalorder %s15, 3
      %p70 = por %p68, %p69
      %p71 = scmp.ne.s32.totalorder %s63, %s66
      %p72 = scmp.eq.s32.totalorder %s15, 0
      %p73 = por %p71, %p72
      %p74 = scmp.ne.s32.totalorder %s63, %s66
      %p75 = scmp.eq.s32.totalorder %s20, 3
      %p76 = por %p74, %p75
      %p77 = scmp.ne.s32.totalorder %s66, %s67
      %p78 = scmp.eq.s32.totalorder %s20, 0
      %p79 = por %p77, %p78
      %p80 = scmp.ne.s32.totalorder %s66, %s67
      %p81 = scmp.eq.s32.totalorder %s21, 3
      %p82 = por %p80, %p81
      %p84 = scmp.ne.s32.totalorder %s67, %s83
      %p85 = scmp.eq.s32.totalorder %s21, 0
      %p86 = por %p84, %p85
      %s87 = ssub.s32 %s23, %s30
      %p88 = scmp.eq.s32.totalorder %s87, 0
      %s90 = sadd.s32 %s89, 1
      %s91 = scalar_select %p88, %s89, %s90
      %p94 = pneg %p88
      %p95 = scmp.eq.s32.totalorder %s15, 3
      %p96 = por %p94, %p95
      %p97 = scmp.ne.s32.totalorder %s89, %s92
      %p98 = scmp.eq.s32.totalorder %s15, 0
      %p99 = por %p97, %p98
      %p100 = scmp.ne.s32.totalorder %s89, %s92
      %p101 = scmp.eq.s32.totalorder %s20, 3
      %p102 = por %p100, %p101
      %p103 = scmp.ne.s32.totalorder %s92, %s93
      %p104 = scmp.eq.s32.totalorder %s20, 0
      %p105 = por %p103, %p104
      %p106 = scmp.ne.s32.totalorder %s92, %s93
      %p107 = scmp.eq.s32.totalorder %s21, 3
      %p108 = por %p106, %p107
      %p110 = scmp.ne.s32.totalorder %s93, %s109
      %p111 = scmp.eq.s32.totalorder %s21, 0
      %p112 = por %p110, %p111
      %s113 = ssub.s32 %s22, %s34
      %s114 = ssub.s32 %s23, %s30
      %s115 = sor.u32 %s113, %s114
      %p116 = scmp.eq.s32.totalorder %s115, 0
      %s118 = sadd.s32 %s117, 1
      %s119 = scalar_select %p116, %s117, %s118
      %p122 = pneg %p116
      %p123 = scmp.eq.s32.totalorder %s15, 3
      %p124 = por %p122, %p123
      %p125 = scmp.ne.s32.totalorder %s117, %s120
      %p126 = scmp.eq.s32.totalorder %s15, 0
      %p127 = por %p125, %p126
      %p128 = scmp.ne.s32.totalorder %s117, %s120
      %p129 = scmp.eq.s32.totalorder %s20, 3
      %p130 = por %p128, %p129
      %p131 = scmp.ne.s32.totalorder %s120, %s121
      %p132 = scmp.eq.s32.totalorder %s20, 0
      %p133 = por %p131, %p132
      %p134 = scmp.ne.s32.totalorder %s120, %s121
      %p135 = scmp.eq.s32.totalorder %s21, 3
      %p136 = por %p134, %p135
      %p138 = scmp.ne.s32.totalorder %s121, %s137
      %p139 = scmp.eq.s32.totalorder %s21, 0
      %p140 = por %p138, %p139
      %s142 = sadd.s32 %s141, 1
      %p145 = scmp.eq.s32.totalorder %s15, 3
      %p146 = scmp.ne.s32.totalorder %s141, %s143
      %p147 = scmp.eq.s32.totalorder %s15, 0
      %p148 = por %p146, %p147
      %p149 = scmp.ne.s32.totalorder %s141, %s143
      %p150 = scmp.eq.s32.totalorder %s20, 3
      %p151 = por %p149, %p150
      %p152 = scmp.ne.s32.totalorder %s143, %s144
      %p153 = scmp.eq.s32.totalorder %s20, 0
      %p154 = por %p152, %p153
      %p155 = scmp.ne.s32.totalorder %s143, %s144
      %p156 = scmp.eq.s32.totalorder %s21, 3
      %p157 = por %p155, %p156
      %p159 = scmp.ne.s32.totalorder %s144, %s158
      %p160 = scmp.eq.s32.totalorder %s21, 0
      %p161 = por %p159, %p160
      %s163 = sadd.s32 %s162, 1
      %p166 = scmp.eq.s32.totalorder %s15, 3
      %p167 = scmp.ne.s32.totalorder %s162, %s164
      %p168 = scmp.eq.s32.totalorder %s15, 0
      %p169 = por %p167, %p168
      %p170 = scmp.ne.s32.totalorder %s162, %s164
      %p171 = scmp.eq.s32.totalorder %s20, 3
      %p172 = por %p170, %p171
      %p173 = scmp.ne.s32.totalorder %s164, %s165
      %p174 = scmp.eq.s32.totalorder %s20, 0
      %p175 = por %p173, %p174
      %p176 = scmp.ne.s32.totalorder %s164, %s165
      %p177 = scmp.eq.s32.totalorder %s21, 3
      %p178 = por %p176, %p177
      %p180 = scmp.ne.s32.totalorder %s165, %s179
      %p181 = scmp.eq.s32.totalorder %s21, 0
      %p182 = por %p180, %p181
      %s183 = ssub.s32 %s22, %s34
      %p184 = scmp.eq.s32.totalorder %s183, 0
      %s186 = sadd.s32 %s185, 1
      %s187 = scalar_select %p184, %s185, %s186
      %p190 = pneg %p184
      %p191 = scmp.eq.s32.totalorder %s15, 3
      %p192 = por %p190, %p191
      %p193 = scmp.ne.s32.totalorder %s185, %s188
      %p194 = scmp.eq.s32.totalorder %s15, 0
      %p195 = por %p193, %p194
      %p196 = scmp.ne.s32.totalorder %s185, %s188
      %p197 = scmp.eq.s32.totalorder %s20, 3
      %p198 = por %p196, %p197
      %p199 = scmp.ne.s32.totalorder %s188, %s189
      %p200 = scmp.eq.s32.totalorder %s20, 0
      %p201 = por %p199, %p200
      %p202 = scmp.ne.s32.totalorder %s188, %s189
      %p203 = scmp.eq.s32.totalorder %s21, 3
      %p204 = por %p202, %p203
      %p206 = scmp.ne.s32.totalorder %s189, %s205
      %p207 = scmp.eq.s32.totalorder %s21, 0
      %p208 = por %p206, %p207
      %p209 = scmp.le.s32.totalorder 1, %s15
      %p210 = scmp.lt.s32.totalorder %s15, 5
      %p211 = pnand %p209, %p210
      %p212 = pneg %p211
      // Predicated region
      $region9: #{tpu_custom_call.1} parent=5 // pred_check
        _
      $region10: #{tpu_custom_call.1} parent=5 // pred_check_branch
        %214 = sbr.rel (%p211) target = $region12
      $region11: #{tpu_custom_call.1} parent=5 // pred_region
        %s215 = ssub.s32 %s15, 1
        // Predicated region
        $region13: #{tpu_custom_call.1} parent=11 // pred_check
          %p216 = pneg %p154
        $region14: #{tpu_custom_call.1} parent=11 // pred_check_branch
          %218 = sbr.rel (%p216) target = $region16
        $region15: #{tpu_custom_call.1} parent=11 // pred_region
          _
        $region16: #{tpu_custom_call.1} parent=11 // pred_fallthru
          _
        // Predicated region
        $region17: #{tpu_custom_call.1} parent=11 // pred_check
          %p219 = pneg %p175
        $region18: #{tpu_custom_call.1} parent=11 // pred_check_branch
          %221 = sbr.rel (%p219) target = $region20
        $region19: #{tpu_custom_call.1} parent=11 // pred_region
          _
        $region20: #{tpu_custom_call.1} parent=11 // pred_fallthru
          _
      $region12: #{tpu_custom_call.1} parent=5 // pred_fallthru
        _
      %p222 = scmp.lt.s32.totalorder %s15, 4
      // Predicated region
      $region21: #{tpu_custom_call.1} parent=5 // pred_check
        %p223 = pneg %p222
      $region22: #{tpu_custom_call.1} parent=5 // pred_check_branch
        %225 = sbr.rel (%p223) target = $region24
      $region23: #{tpu_custom_call.1} parent=5 // pred_region
        // Predicated region
        $region25: #{tpu_custom_call.1} parent=23 // pred_check
          %p226 = pneg %p47
        $region26: #{tpu_custom_call.1} parent=23 // pred_check_branch
          %228 = sbr.rel (%p226) target = $region28
        $region27: #{tpu_custom_call.1} parent=23 // pred_region
          %s229 = smul.u32 4, %s22
          %p230 = scmp.lt.s32.totalorder %s229, 7
          %s231 = scalar_select %p230, %s229, 7
          %s232 = smul.addr %s231, 8
          %s233 = scalar_lea.vmem %s0, %s232
          %s234 = smul.u32 4, %s22
        $region28: #{tpu_custom_call.1} parent=23 // pred_fallthru
          _
        // Predicated region
        $region29: #{tpu_custom_call.1} parent=23 // pred_check
          %p235 = pneg %p73
        $region30: #{tpu_custom_call.1} parent=23 // pred_check_branch
          %237 = sbr.rel (%p235) target = $region32
        $region31: #{tpu_custom_call.1} parent=23 // pred_region
          %s238 = smul.u32 4, %s22
          %p239 = scmp.lt.s32.totalorder %s238, 7
          %s240 = scalar_select %p239, %s238, 7
          %s241 = smul.addr %s240, 8
          %s242 = scalar_lea.vmem %s1, %s241
          %s243 = smul.u32 4, %s22
        $region32: #{tpu_custom_call.1} parent=23 // pred_fallthru
          _
        // Predicated region
        $region33: #{tpu_custom_call.1} parent=23 // pred_check
          %p244 = pneg %p99
        $region34: #{tpu_custom_call.1} parent=23 // pred_check_branch
          %246 = sbr.rel (%p244) target = $region36
        $region35: #{tpu_custom_call.1} parent=23 // pred_region
          %s247 = smul.u32 16, %s23
          %p248 = scmp.lt.s32.totalorder %s247, 31
          %s249 = scalar_select %p248, %s247, 31
          %s250 = smul.addr %s249, 4
          %s251 = scalar_lea.vmem %s2, %s250
          %s252 = smul.u32 16, %s23
        $region36: #{tpu_custom_call.1} parent=23 // pred_fallthru
          _
        // Predicated region
        $region37: #{tpu_custom_call.1} parent=23 // pred_check
          %p253 = pneg %p127
        $region38: #{tpu_custom_call.1} parent=23 // pred_check_branch
          %255 = sbr.rel (%p253) target = $region40
        $region39: #{tpu_custom_call.1} parent=23 // pred_region
          %s256 = sand.u32 %s117, 1
          %s257 = sand.u32 %s117, 1
          %s258 = smul.addr %s257, 16
          %s259 = scalar_lea.vmem [#allocation3], %s258
          %s260 = smul.u32 4, %s22
          %s261 = smul.addr %s260, 2
          %s262 = sadd.s32 %s23, %s261
          %s263 = smul.addr %s262, 4
          %s264 = scalar_lea.vmem %s3, %s263
          // Predicated region
          $region41: #{tpu_custom_call.1} parent=39 // pred_check
            _
          $region42: #{tpu_custom_call.1} parent=39 // pred_check_branch
            %266 = sbr.rel (0) target = $region44
          $region43: #{tpu_custom_call.1} parent=39 // pred_region
            // Predicated region
            $region45: #{tpu_custom_call.1} parent=43 // pred_check
              _
            $region46: #{tpu_custom_call.1} parent=43 // pred_check_branch
              %268 = sbr.rel target = $region48
            $region47: #{tpu_custom_call.1} parent=43 // pred_region
              // Predicated region
              $region60: #{tpu_custom_call.1} parent=47 // pred_check
                _
              $region61: #{tpu_custom_call.1} parent=47 // pred_check_branch
                %289 = sbr.rel (0) target = $region63
              $region62: #{tpu_custom_call.1} parent=47 // pred_region
                loop: start=0, step=1, limit=1
                $region64: #{tpu_custom_call.1} parent=62 // loop_pre_header
                  _
                $region65: #{tpu_custom_call.1} parent=62 // loop_header
                  %s291 = sphi 0, %s295
                  %p292 = scmp.ge.s32.totalorder %s291, 1
                  %s296 = sphi %s264, %s264
                  %s297 = sphi %s259, %s259
                $region66: #{tpu_custom_call.1} parent=62 // loop_header_branch
                  %294 = sbr.rel (%p292) target = $region70
                $region67: #{tpu_custom_call.1} parent=62 // loop_body
                  _
                $region68: #{tpu_custom_call.1} parent=62 // loop_footer
                  %s295 = sadd.s32 1, %s291
                $region69: #{tpu_custom_call.1} parent=62 // loop_footer_branch
                  %290 = sbr.rel target = $region65
                $region70: #{tpu_custom_call.1} parent=62 // loop_exit
                  _
                loop: start=0, step=1, limit=1
                $region71: #{tpu_custom_call.1} parent=62 // loop_pre_header
                  _
                $region72: #{tpu_custom_call.1} parent=62 // loop_header
                  %s300 = sphi 0, %s304
                  %p301 = scmp.ge.s32.totalorder %s300, 1
                  %s305 = sphi %s264, %s264
                  %s306 = sphi %s259, %s259
                $region73: #{tpu_custom_call.1} parent=62 // loop_header_branch
                  %303 = sbr.rel (%p301) target = $region77
                $region74: #{tpu_custom_call.1} parent=62 // loop_body
                  %v307 = vld [vmem:[%s305] sm:$0xf]
                  %308 = vst [vmem:[%s306] sm:$0xf] %v307
                  %v309 = vld [vmem:[%s305 + $0x8] sm:$0xf]
                  %310 = vst [vmem:[%s306 + $0x4] sm:$0xf] %v309
                  %v311 = vld [vmem:[%s305 + $0x10] sm:$0xf]
                  %312 = vst [vmem:[%s306 + $0x8] sm:$0xf] %v311
                  %v313 = vld [vmem:[%s305 + $0x18] sm:$0xf]
                  %314 = vst [vmem:[%s306 + $0xc] sm:$0xf] %v313
                $region75: #{tpu_custom_call.1} parent=62 // loop_footer
                  %s304 = sadd.s32 1, %s300
                $region76: #{tpu_custom_call.1} parent=62 // loop_footer_branch
                  %299 = sbr.rel target = $region72
                $region77: #{tpu_custom_call.1} parent=62 // loop_exit
                  _
              $region63: #{tpu_custom_call.1} parent=47 // pred_fallthru
                _
            $region48: #{tpu_custom_call.1} parent=43 // pred_fallthru
              _
            // Predicated region
            $region49: #{tpu_custom_call.1} parent=43 // pred_check
              _
            $region50: #{tpu_custom_call.1} parent=43 // pred_check_branch
              %270 = sbr.rel (0) target = $region52
            $region51: #{tpu_custom_call.1} parent=43 // pred_region
              loop: start=0, step=1, limit=1
              $region53: #{tpu_custom_call.1} parent=51 // loop_pre_header
                _
              $region54: #{tpu_custom_call.1} parent=51 // loop_header
                %s273 = sphi 0, %s277
                %p274 = scmp.ge.s32.totalorder %s273, 1
                %s278 = sphi %s264, %s264
                %s279 = sphi %s259, %s259
              $region55: #{tpu_custom_call.1} parent=51 // loop_header_branch
                %276 = sbr.rel (%p274) target = $region59
              $region56: #{tpu_custom_call.1} parent=51 // loop_body
                %v280 = vld [vmem:[%s278] sm:$0xf]
                %281 = vst [vmem:[%s279] sm:$0xf] %v280
                %v282 = vld [vmem:[%s278 + $0x8] sm:$0xf]
                %283 = vst [vmem:[%s279 + $0x4] sm:$0xf] %v282
                %v284 = vld [vmem:[%s278 + $0x10] sm:$0xf]
                %285 = vst [vmem:[%s279 + $0x8] sm:$0xf] %v284
                %v286 = vld [vmem:[%s278 + $0x18] sm:$0xf]
                %287 = vst [vmem:[%s279 + $0xc] sm:$0xf] %v286
              $region57: #{tpu_custom_call.1} parent=51 // loop_footer
                %s277 = sadd.s32 1, %s273
              $region58: #{tpu_custom_call.1} parent=51 // loop_footer_branch
                %272 = sbr.rel target = $region54
              $region59: #{tpu_custom_call.1} parent=51 // loop_exit
                _
            $region52: #{tpu_custom_call.1} parent=43 // pred_fallthru
              _
          $region44: #{tpu_custom_call.1} parent=39 // pred_fallthru
            _
          %315 = vnop
        $region40: #{tpu_custom_call.1} parent=23 // pred_fallthru
          _
      $region24: #{tpu_custom_call.1} parent=5 // pred_fallthru
        _
      %p316 = scmp.le.s32.totalorder 1, %s15
      %p317 = scmp.lt.s32.totalorder %s15, 5
      %p318 = pnand %p316, %p317
      %p319 = pneg %p318
      // Predicated region
      $region78: #{tpu_custom_call.1} parent=5 // pred_check
        _
      $region79: #{tpu_custom_call.1} parent=5 // pred_check_branch
        %321 = sbr.rel (%p318) target = $region81
      $region80: #{tpu_custom_call.1} parent=5 // pred_region
        %s322 = ssub.s32 %s15, 1
        %s323 = sand.u32 %s120, 1
        %s324 = sand.u32 %s120, 1
        %s325 = smul.addr %s324, 16
        %s326 = scalar_lea.vmem [#allocation3], %s325
        // Predicated region
        $region82: #{tpu_custom_call.1} parent=80 // pred_check
          %p327 = pneg %p133
        $region83: #{tpu_custom_call.1} parent=80 // pred_check_branch
          %329 = sbr.rel (%p327) target = $region85
        $region84: #{tpu_custom_call.1} parent=80 // pred_region
          _
        $region85: #{tpu_custom_call.1} parent=80 // pred_fallthru
          _
        %s330 = smul.u32 4, %s24
        %p331 = scmp.lt.s32.totalorder %s330, 7
        %s332 = scalar_select %p331, %s330, 7
        %s333 = smul.addr %s332, 8
        %s334 = scalar_lea.vmem %s0, %s333
        %p335 = pneg %p53
        %p336 = pneg %p50
        %s337 = smul.u32 4, %s24
        %p338 = scmp.lt.s32.totalorder %s337, 7
        %s339 = scalar_select %p338, %s337, 7
        %s340 = smul.addr %s339, 8
        %s341 = scalar_lea.vmem %s1, %s340
        %p342 = pneg %p79
        %p343 = pneg %p76
        %s344 = smul.u32 16, %s25
        %p345 = scmp.lt.s32.totalorder %s344, 31
        %s346 = scalar_select %p345, %s344, 31
        %s347 = smul.addr %s346, 4
        %s348 = scalar_lea.vmem %s2, %s347
        %p349 = pneg %p105
        %p350 = pneg %p102
        %s351 = sand.u32 %s120, 1
        %s352 = sand.u32 %s120, 1
        %s353 = smul.addr %s352, 16
        %s354 = scalar_lea.vmem [#allocation3], %s353
        %p355 = pneg %p133
        %p356 = pneg %p130
        %p357 = pneg %p154
        %p358 = pneg %p151
        %p359 = pneg %p175
        %p360 = pneg %p172
        %p361 = pneg %p201
        %p362 = pneg %p198
        %s363 = sand.u32 %s188, 1
        %s364 = scalar_lea.sflag [#allocation5], %s363
        %s365 = sand.u32 %s188, 1
        %s366 = smul.addr %s365, 32
        %s367 = scalar_lea.vmem [#allocation4], %s366
        %s368 = smul.u32 4, %s24
        %p369 = scmp.lt.s32.totalorder %s368, 7
        %s370 = scalar_select %p369, %s368, 7
        %s371 = smul.addr %s370, 8
        %s372 = scalar_lea.vmem %s0, %s371
        %s373 = smul.u32 4, %s24
        %s374 = smul.u32 4, %s24
        %p375 = scmp.lt.s32.totalorder %s374, 7
        %s376 = scalar_select %p375, %s374, 7
        %s377 = smul.addr %s376, 8
        %s378 = scalar_lea.vmem %s1, %s377
        %s379 = smul.u32 4, %s24
        %s380 = smul.u32 16, %s25
        %p381 = scmp.lt.s32.totalorder %s380, 31
        %s382 = scalar_select %p381, %s380, 31
        %s383 = smul.addr %s382, 4
        %s384 = scalar_lea.vmem %s2, %s383
        %s385 = smul.u32 16, %s25
        %s386 = smul.u32 4, %s24
        %s387 = smul.u32 4, %s24
        %p389 = scmp.eq.s32.totalorder %s25, 0
        // Predicated region
        $region86: #{tpu_custom_call.1} parent=80 // pred_check
          %p390 = pneg %p389
        $region87: #{tpu_custom_call.1} parent=80 // pred_check_branch
          %392 = sbr.rel (%p390) target = $region89
        $region88: #{tpu_custom_call.1} parent=80 // pred_region
          %v393 = vld [vmem:[%s378] sm:$0xff]
          %v394 = vld [vmem:[%s378 + $0x8] sm:$0xff]
          %v395 = vld [vmem:[%s378 + $0x10] sm:$0xff]
          %v396 = vld [vmem:[%s378 + $0x18] sm:$0xff]
          %vm397 = vcmask 523264
          %398 = vst.msk [vmem:[#allocation2] sm:$0xff] %vm397, %v393
          %399 = vst.msk [vmem:[#allocation2 + $0x8] sm:$0xff] %vm397, %v394
          %400 = vst.msk [vmem:[#allocation2 + $0x10] sm:$0xff] %vm397, %v395
          %401 = vst.msk [vmem:[#allocation2 + $0x18] sm:$0xff] %vm397, %v396
        $region89: #{tpu_custom_call.1} parent=80 // pred_fallthru
          _
        %v402 = vld [vmem:[#allocation2] sm:$0xff]
        %v403 = vld [vmem:[#allocation2 + $0x8] sm:$0xff]
        %v404 = vld [vmem:[#allocation2 + $0x10] sm:$0xff]
        %v405 = vld [vmem:[#allocation2 + $0x18] sm:$0xff]
        %v406 = vld [vmem:[%s326] sm:$0xf]
        %v407 = vld [vmem:[%s326 + $0x4] sm:$0xf]
        %v408 = vld [vmem:[%s326 + $0x8] sm:$0xf]
        %v409 = vld [vmem:[%s326 + $0xc] sm:$0xf]
        %v410 = vld [vmem:[%s384] sm:$0xf]
        %v411 = vld [vmem:[%s384 + $0x4] sm:$0xf]
        %v412 = vld [vmem:[%s384 + $0x8] sm:$0xf]
        %v413 = vld [vmem:[%s384 + $0xc] sm:$0xf]
        %v414 = vld [vmem:[%s384 + $0x10] sm:$0xf]
        %v415 = vld [vmem:[%s384 + $0x14] sm:$0xf]
        %v416 = vld [vmem:[%s384 + $0x18] sm:$0xf]
        %v417 = vld [vmem:[%s384 + $0x1c] sm:$0xf]
        %v418 = vld [vmem:[%s384 + $0x20] sm:$0xf]
        %v419 = vld [vmem:[%s384 + $0x24] sm:$0xf]
        %v420 = vld [vmem:[%s384 + $0x28] sm:$0xf]
        %v421 = vld [vmem:[%s384 + $0x2c] sm:$0xf]
        %v422 = vld [vmem:[%s384 + $0x30] sm:$0xf]
        %v423 = vld [vmem:[%s384 + $0x34] sm:$0xf]
        %v424 = vld [vmem:[%s384 + $0x38] sm:$0xf]
        %v425 = vld [vmem:[%s384 + $0x3c] sm:$0xf]
        %v430 = vunpack.c.l.b16 %v406
        %v431 = vunpack.c.l.b16 %v407
        %v432 = vunpack.c.l.b16 %v408
        %v433 = vunpack.c.l.b16 %v409
        %v434 = vpack.c.b16 %v431, %v430
        %v435 = vpack.c.b16 %v433, %v432
        %v454 = vunpack.c.l.b16 %v410
        %v455 = vunpack.c.l.b16 %v411
        %v456 = vunpack.c.l.b16 %v412
        %v457 = vunpack.c.l.b16 %v413
        %v458 = vunpack.c.l.b16 %v414
        %v459 = vunpack.c.l.b16 %v415
        %v460 = vunpack.c.l.b16 %v416
        %v461 = vunpack.c.l.b16 %v417
        %v462 = vunpack.c.l.b16 %v418
        %v463 = vunpack.c.l.b16 %v419
        %v464 = vunpack.c.l.b16 %v420
        %v465 = vunpack.c.l.b16 %v421
        %v466 = vunpack.c.l.b16 %v422
        %v467 = vunpack.c.l.b16 %v423
        %v468 = vunpack.c.l.b16 %v424
        %v469 = vunpack.c.l.b16 %v425
        %v470 = vpack.c.b16 %v455, %v454
        %v471 = vpack.c.b16 %v457, %v456
        %v472 = vpack.c.b16 %v459, %v458
        %v473 = vpack.c.b16 %v461, %v460
        %v474 = vpack.c.b16 %v463, %v462
        %v475 = vpack.c.b16 %v465, %v464
        %v476 = vpack.c.b16 %v467, %v466
        %v477 = vpack.c.b16 %v469, %v468
        %486 = vmatprep.subr.bf16.mxu0 0
        %487 = vmatpush1.bf16.msra.mxu0 %v470
        %488 = vmatprep.subr.bf16.mxu0 0
        %489 = vmatpush1.bf16.msra.mxu0 %v471
        %490 = vmatprep.subr.bf16.mxu0 0
        %491 = vmatpush1.bf16.msra.mxu0 %v472
        %492 = vmatprep.subr.bf16.mxu0 0
        %493 = vmatpush1.bf16.msra.mxu0 %v473
        %494 = vmatprep.subr.bf16.mxu0 0
        %495 = vmatpush1.bf16.msra.mxu0 %v474
        %496 = vmatprep.subr.bf16.mxu0 0
        %497 = vmatpush1.bf16.msra.mxu0 %v475
        %498 = vmatprep.subr.bf16.mxu0 0
        %499 = vmatpush1.bf16.msra.mxu0 %v476
        %500 = vmatprep.subr.bf16.mxu0 0
        %501 = vmatpush1.bf16.msra.mxu0 %v477
        %502 = vmatprep.subr.bf16.mxu0 0
        %503 = vmatpush1.bf16.msra.mxu0 0
        %504 = vmatprep.subr.bf16.mxu0 0
        %505 = vmatpush1.bf16.msra.mxu0 0
        %506 = vmatprep.subr.bf16.mxu0 0
        %507 = vmatpush1.bf16.msra.mxu0 0
        %508 = vmatprep.subr.bf16.mxu0 0
        %509 = vmatpush1.bf16.msra.mxu0 0
        %510 = vmatprep.subr.bf16.mxu0 0
        %511 = vmatpush1.bf16.msra.mxu0 0
        %512 = vmatprep.subr.bf16.mxu0 0
        %513 = vmatpush1.bf16.msra.mxu0 0
        %514 = vmatprep.subr.bf16.mxu0 0
        %515 = vmatpush1.bf16.msra.mxu0 0
        %516 = vmatprep.subr.bf16.mxu0 0
        %517 = vmatpush1.bf16.msra.mxu0 0
        %518 = vmatprep.mubr.bf16.mxu0 0
        %519 = vmatmul.mubr.bf16.gmra.mrb[0].mxu0 %v434
        %v520 = vpop.f32.mrb[0].mxu0
        %v521 = vadd.f32 0.0, %v520
        %v522 = vpop.f32.mrb[0].mxu0
        %v523 = vpop.f32.mrb[0].mxu0
        %v524 = vadd.f32 0.0, %v523
        %v525 = vpop.f32.mrb[0].mxu0
        %526 = vmatprep.mubr.bf16.mxu0 0
        %527 = vmatmul.mubr.bf16.gmra.mrb[0].mxu0 %v435
        %v528 = vpop.f32.mrb[0].mxu0
        %v529 = vadd.f32 0.0, %v528
        %v530 = vpop.f32.mrb[0].mxu0
        %v531 = vpop.f32.mrb[0].mxu0
        %v532 = vadd.f32 0.0, %v531
        %v533 = vpop.f32.mrb[0].mxu0
        %534 = vdwg.mxu0
        %v535 = vadd.f32 %v402, %v521
        %v536 = vadd.f32 %v403, %v524
        %v537 = vadd.f32 %v404, %v529
        %v538 = vadd.f32 %v405, %v532
        %vm539 = vcmask 523264
        %540 = vst.msk [vmem:[#allocation2] sm:$0xff] %vm539, %v535
        %541 = vst.msk [vmem:[#allocation2 + $0x8] sm:$0xff] %vm539, %v536
        %542 = vst.msk [vmem:[#allocation2 + $0x10] sm:$0xff] %vm539, %v537
        %543 = vst.msk [vmem:[#allocation2 + $0x18] sm:$0xff] %vm539, %v538
        %p544 = scmp.eq.s32.totalorder %s25, 1
        // Predicated region
        $region90: #{tpu_custom_call.1} parent=80 // pred_check
          %p545 = pneg %p544
        $region91: #{tpu_custom_call.1} parent=80 // pred_check_branch
          %547 = sbr.rel (%p545) target = $region93
        $region92: #{tpu_custom_call.1} parent=80 // pred_region
          %v548 = vld [vmem:[%s372] sm:$0xff]
          %v549 = vld [vmem:[%s372 + $0x8] sm:$0xff]
          %v550 = vld [vmem:[%s372 + $0x10] sm:$0xff]
          %v551 = vld [vmem:[%s372 + $0x18] sm:$0xff]
          %v552 = vld [vmem:[#allocation2] sm:$0xff]
          %v553 = vld [vmem:[#allocation2 + $0x8] sm:$0xff]
          %v554 = vld [vmem:[#allocation2 + $0x10] sm:$0xff]
          %v555 = vld [vmem:[#allocation2 + $0x18] sm:$0xff]
          %560 = vrot.lane.b32.xlu0 %v548, 32
          %v561 = vpop.permute.xlu0 %560
          %562 = vrot.lane.b32.xlu0 %v549, 32
          %v563 = vpop.permute.xlu0 %562
          %564 = vrot.lane.b32.xlu0 %v550, 32
          %v565 = vpop.permute.xlu0 %564
          %566 = vrot.lane.b32.xlu0 %v551, 32
          %v567 = vpop.permute.xlu0 %566
          %vm572 = vcmask 261120
          %v573 = vsel %vm572, %v552, %v561
          %v574 = vsel %vm572, %v553, %v563
          %v575 = vsel %vm572, %v554, %v565
          %v576 = vsel %vm572, %v555, %v567
          %v577 = vld [vmem:[%s4] sm:$0xff]
          %v578 = vld [vmem:[%s4 + $0x8] sm:$0xff]
          %v579 = vld [vmem:[%s4 + $0x10] sm:$0xff]
          %v580 = vld [vmem:[%s4 + $0x18] sm:$0xff]
          %v581 = vld [vmem:[%s4 + $0x20] sm:$0xff]
          %v582 = vld [vmem:[%s4 + $0x28] sm:$0xff]
          %v583 = vld [vmem:[%s4 + $0x30] sm:$0xff]
          %v584 = vld [vmem:[%s4 + $0x38] sm:$0xff]
          %v585 = vld [vmem:[%s5] sm:$0x1]
          %v587 = vlaneseq
          %v588 = vshrl.u32 %v587, 7
          %v589 = vsub.s32 0, %v588
          %v590 = vrot.slane %v585, %v589
          %v593 = vsel %vm539, %v573, 0
          %v596 = vsel %vm539, %v574, 0
          %v599 = vsel %vm539, %v575, 0
          %v602 = vsel %vm539, %v576, 0
          %604 = vmatprep.subr.mxu0 0.0
          %605 = vmatpush1.msra.mxu0 %v577
          %606 = vmatprep.subr.mxu0 0.0
          %607 = vmatpush1.msra.mxu0 %v578
          %608 = vmatprep.subr.mxu0 0.0
          %609 = vmatpush1.msra.mxu0 %v579
          %610 = vmatprep.subr.mxu0 0.0
          %611 = vmatpush1.msra.mxu0 %v580
          %612 = vmatprep.subr.mxu0 0.0
          %613 = vmatpush1.msra.mxu0 %v581
          %614 = vmatprep.subr.mxu0 0.0
          %615 = vmatpush1.msra.mxu0 %v582
          %616 = vmatprep.subr.mxu0 0.0
          %617 = vmatpush1.msra.mxu0 %v583
          %618 = vmatprep.subr.mxu0 0.0
          %619 = vmatpush1.msra.mxu0 %v584
          %620 = vmatprep.subr.mxu0 0.0
          %621 = vmatpush1.msra.mxu0 0.0
          %622 = vmatprep.subr.mxu0 0.0
          %623 = vmatpush1.msra.mxu0 0.0
          %624 = vmatprep.subr.mxu0 0.0
          %625 = vmatpush1.msra.mxu0 0.0
          %626 = vmatprep.subr.mxu0 0.0
          %627 = vmatpush1.msra.mxu0 0.0
          %628 = vmatprep.subr.mxu0 0.0
          %629 = vmatpush1.msra.mxu0 0.0
          %630 = vmatprep.subr.mxu0 0.0
          %631 = vmatpush1.msra.mxu0 0.0
          %632 = vmatprep.subr.mxu0 0.0
          %633 = vmatpush1.msra.mxu0 0.0
          %634 = vmatprep.subr.mxu0 0.0
          %635 = vmatpush1.msra.mxu0 0.0
          %636 = vmatprep.subr.mxu0 0.0
          %637 = vmatpush1.msra.mxu0 0.0
          %638 = vmatprep.subr.mxu0 0.0
          %639 = vmatpush1.msra.mxu0 0.0
          %640 = vmatprep.subr.mxu0 0.0
          %641 = vmatpush1.msra.mxu0 0.0
          %642 = vmatprep.subr.mxu0 0.0
          %643 = vmatpush1.msra.mxu0 0.0
          %644 = vmatprep.subr.mxu0 0.0
          %645 = vmatpush1.msra.mxu0 0.0
          %646 = vmatprep.subr.mxu0 0.0
          %647 = vmatpush1.msra.mxu0 0.0
          %648 = vmatprep.subr.mxu0 0.0
          %649 = vmatpush1.msra.mxu0 0.0
          %650 = vmatprep.subr.mxu0 0.0
          %651 = vmatpush1.msra.mxu0 0.0
          %652 = vmatprep.subr.mxu0 0.0
          %653 = vmatpush1.msra.mxu0 0.0
          %654 = vmatprep.subr.mxu0 0.0
          %655 = vmatpush1.msra.mxu0 0.0
          %656 = vmatprep.subr.mxu0 0.0
          %657 = vmatpush1.msra.mxu0 0.0
          %658 = vmatprep.subr.mxu0 0.0
          %659 = vmatpush1.msra.mxu0 0.0
          %660 = vmatprep.subr.mxu0 0.0
          %661 = vmatpush1.msra.mxu0 0.0
          %662 = vmatprep.subr.mxu0 0.0
          %663 = vmatpush1.msra.mxu0 0.0
          %664 = vmatprep.subr.mxu0 0.0
          %665 = vmatpush1.msra.mxu0 0.0
          %666 = vmatprep.subr.mxu0 0.0
          %667 = vmatpush1.msra.mxu0 0.0
          %668 = vmatprep.mubr.f32.mxu0 0.0
          %669 = vmatmul.mubr.f32.gmra.mrb[0].mxu0 %v593
          %v670 = vpop.f32.mrb[0].mxu0
          %v671 = vadd.f32 %v590, %v670
          %v672 = vpop.f32.mrb[0].mxu0
          %673 = vmatprep.mubr.f32.mxu0 0.0
          %674 = vmatmul.mubr.f32.gmra.mrb[0].mxu0 %v596
          %v675 = vpop.f32.mrb[0].mxu0
          %v676 = vadd.f32 %v590, %v675
          %v677 = vpop.f32.mrb[0].mxu0
          %678 = vmatprep.mubr.f32.mxu0 0.0
          %679 = vmatmul.mubr.f32.gmra.mrb[0].mxu0 %v599
          %v680 = vpop.f32.mrb[0].mxu0
          %v681 = vadd.f32 %v590, %v680
          %v682 = vpop.f32.mrb[0].mxu0
          %683 = vmatprep.mubr.f32.mxu0 0.0
          %684 = vmatmul.mubr.f32.gmra.mrb[0].mxu0 %v602
          %v685 = vpop.f32.mrb[0].mxu0
          %v686 = vadd.f32 %v590, %v685
          %v687 = vpop.f32.mrb[0].mxu0
          %688 = vdwg.mxu0
          %v689 = vsel %vm572, %v671, 0.0
          %690 = vadd.xlane.f32.xlu0 %v689
          %v691 = vpop.xlane.xlu0 %690
          %v692 = vsel %vm572, %v676, 0.0
          %693 = vadd.xlane.f32.xlu0 %v692
          %v694 = vpop.xlane.xlu0 %693
          %v695 = vsel %vm572, %v681, 0.0
          %696 = vadd.xlane.f32.xlu0 %v695
          %v697 = vpop.xlane.xlu0 %696
          %v698 = vsel %vm572, %v686, 0.0
          %699 = vadd.xlane.f32.xlu0 %v698
          %v700 = vpop.xlane.xlu0 %699
          %v701 = vrcp.pop 32.0
          %v702 = vmul.f32 %v691, %v701
          %v703 = vmul.f32 %v694, %v701
          %v704 = vmul.f32 %v697, %v701
          %v705 = vmul.f32 %v700, %v701
          %v706 = vsub.f32 %v671, %v702
          %v707 = vsub.f32 %v676, %v703
          %v708 = vsub.f32 %v681, %v704
          %v709 = vsub.f32 %v686, %v705
          %v710 = vmul.f32 %v706, %v706
          %v711 = vmul.f32 %v707, %v707
          %v712 = vmul.f32 %v708, %v708
          %v713 = vmul.f32 %v709, %v709
          %v714 = vsel %vm572, %v710, 0.0
          %715 = vadd.xlane.f32.xlu0 %v714
          %v716 = vpop.xlane.xlu0 %715
          %v717 = vsel %vm572, %v711, 0.0
          %718 = vadd.xlane.f32.xlu0 %v717
          %v719 = vpop.xlane.xlu0 %718
          %v720 = vsel %vm572, %v712, 0.0
          %721 = vadd.xlane.f32.xlu0 %v720
          %v722 = vpop.xlane.xlu0 %721
          %v723 = vsel %vm572, %v713, 0.0
          %724 = vadd.xlane.f32.xlu0 %v723
          %v725 = vpop.xlane.xlu0 %724
          %v726 = vmul.f32 %v716, %v701
          %v727 = vmul.f32 %v719, %v701
          %v728 = vmul.f32 %v722, %v701
          %v729 = vmul.f32 %v725, %v701
          %v730 = vadd.f32 %v726, 1e-05
          %v731 = vadd.f32 %v727, 1e-05
          %v732 = vadd.f32 %v728, 1e-05
          %v733 = vadd.f32 %v729, 1e-05
          %v734 = vrsqrt.pop %v730
          %v735 = vrsqrt.pop %v731
          %v736 = vrsqrt.pop %v732
          %v737 = vrsqrt.pop %v733
          %v738 = vmul.f32 %v706, %v734
          %v739 = vmul.f32 %v707, %v735
          %v740 = vmul.f32 %v708, %v736
          %v741 = vmul.f32 %v709, %v737
          %v742 = vmax.f32 %v738, 0.0
          %v743 = vmax.f32 %v739, 0.0
          %v744 = vmax.f32 %v740, 0.0
          %v745 = vmax.f32 %v741, 0.0
          %v746 = vadd.f32 %v742, %v548
          %v747 = vadd.f32 %v743, %v549
          %v748 = vadd.f32 %v744, %v550
          %v749 = vadd.f32 %v745, %v551
          %754 = vrot.lane.b32.xlu0 %v552, 96
          %v755 = vpop.permute.xlu0 %754
          %756 = vrot.lane.b32.xlu0 %v553, 96
          %v757 = vpop.permute.xlu0 %756
          %758 = vrot.lane.b32.xlu0 %v554, 96
          %v759 = vpop.permute.xlu0 %758
          %760 = vrot.lane.b32.xlu0 %v555, 96
          %v761 = vpop.permute.xlu0 %760
          %v766 = vsel %vm572, %v755, %v548
          %v767 = vsel %vm572, %v757, %v549
          %v768 = vsel %vm572, %v759, %v550
          %v769 = vsel %vm572, %v761, %v551
          %v771 = vsel %vm539, %v766, 0
          %v774 = vsel %vm539, %v767, 0
          %v777 = vsel %vm539, %v768, 0
          %v780 = vsel %vm539, %v769, 0
          %782 = vmatprep.subr.mxu0 0.0
          %783 = vmatpush1.msra.mxu0 %v577
          %784 = vmatprep.subr.mxu0 0.0
          %785 = vmatpush1.msra.mxu0 %v578
          %786 = vmatprep.subr.mxu0 0.0
          %787 = vmatpush1.msra.mxu0 %v579
          %788 = vmatprep.subr.mxu0 0.0
          %789 = vmatpush1.msra.mxu0 %v580
          %790 = vmatprep.subr.mxu0 0.0
          %791 = vmatpush1.msra.mxu0 %v581
          %792 = vmatprep.subr.mxu0 0.0
          %793 = vmatpush1.msra.mxu0 %v582
          %794 = vmatprep.subr.mxu0 0.0
          %795 = vmatpush1.msra.mxu0 %v583
          %796 = vmatprep.subr.mxu0 0.0
          %797 = vmatpush1.msra.mxu0 %v584
          %798 = vmatprep.subr.mxu0 0.0
          %799 = vmatpush1.msra.mxu0 0.0
          %800 = vmatprep.subr.mxu0 0.0
          %801 = vmatpush1.msra.mxu0 0.0
          %802 = vmatprep.subr.mxu0 0.0
          %803 = vmatpush1.msra.mxu0 0.0
          %804 = vmatprep.subr.mxu0 0.0
          %805 = vmatpush1.msra.mxu0 0.0
          %806 = vmatprep.subr.mxu0 0.0
          %807 = vmatpush1.msra.mxu0 0.0
          %808 = vmatprep.subr.mxu0 0.0
          %809 = vmatpush1.msra.mxu0 0.0
          %810 = vmatprep.subr.mxu0 0.0
          %811 = vmatpush1.msra.mxu0 0.0
          %812 = vmatprep.subr.mxu0 0.0
          %813 = vmatpush1.msra.mxu0 0.0
          %814 = vmatprep.subr.mxu0 0.0
          %815 = vmatpush1.msra.mxu0 0.0
          %816 = vmatprep.subr.mxu0 0.0
          %817 = vmatpush1.msra.mxu0 0.0
          %818 = vmatprep.subr.mxu0 0.0
          %819 = vmatpush1.msra.mxu0 0.0
          %820 = vmatprep.subr.mxu0 0.0
          %821 = vmatpush1.msra.mxu0 0.0
          %822 = vmatprep.subr.mxu0 0.0
          %823 = vmatpush1.msra.mxu0 0.0
          %824 = vmatprep.subr.mxu0 0.0
          %825 = vmatpush1.msra.mxu0 0.0
          %826 = vmatprep.subr.mxu0 0.0
          %827 = vmatpush1.msra.mxu0 0.0
          %828 = vmatprep.subr.mxu0 0.0
          %829 = vmatpush1.msra.mxu0 0.0
          %830 = vmatprep.subr.mxu0 0.0
          %831 = vmatpush1.msra.mxu0 0.0
          %832 = vmatprep.subr.mxu0 0.0
          %833 = vmatpush1.msra.mxu0 0.0
          %834 = vmatprep.subr.mxu0 0.0
          %835 = vmatpush1.msra.mxu0 0.0
          %836 = vmatprep.subr.mxu0 0.0
          %837 = vmatpush1.msra.mxu0 0.0
          %838 = vmatprep.subr.mxu0 0.0
          %839 = vmatpush1.msra.mxu0 0.0
          %840 = vmatprep.subr.mxu0 0.0
          %841 = vmatpush1.msra.mxu0 0.0
          %842 = vmatprep.subr.mxu0 0.0
          %843 = vmatpush1.msra.mxu0 0.0
          %844 = vmatprep.subr.mxu0 0.0
          %845 = vmatpush1.msra.mxu0 0.0
          %846 = vmatprep.mubr.f32.mxu0 0.0
          %847 = vmatmul.mubr.f32.gmra.mrb[0].mxu0 %v771
          %v848 = vpop.f32.mrb[0].mxu0
          %v849 = vadd.f32 %v590, %v848
          %v850 = vpop.f32.mrb[0].mxu0
          %851 = vmatprep.mubr.f32.mxu0 0.0
          %852 = vmatmul.mubr.f32.gmra.mrb[0].mxu0 %v774
          %v853 = vpop.f32.mrb[0].mxu0
          %v854 = vadd.f32 %v590, %v853
          %v855 = vpop.f32.mrb[0].mxu0
          %856 = vmatprep.mubr.f32.mxu0 0.0
          %857 = vmatmul.mubr.f32.gmra.mrb[0].mxu0 %v777
          %v858 = vpop.f32.mrb[0].mxu0
          %v859 = vadd.f32 %v590, %v858
          %v860 = vpop.f32.mrb[0].mxu0
          %861 = vmatprep.mubr.f32.mxu0 0.0
          %862 = vmatmul.mubr.f32.gmra.mrb[0].mxu0 %v780
          %v863 = vpop.f32.mrb[0].mxu0
          %v864 = vadd.f32 %v590, %v863
          %v865 = vpop.f32.mrb[0].mxu0
          %866 = vdwg.mxu0
          %v867 = vsel %vm572, %v849, 0.0
          %868 = vadd.xlane.f32.xlu0 %v867
          %v869 = vpop.xlane.xlu0 %868
          %v870 = vsel %vm572, %v854, 0.0
          %871 = vadd.xlane.f32.xlu0 %v870
          %v872 = vpop.xlane.xlu0 %871
          %v873 = vsel %vm572, %v859, 0.0
          %874 = vadd.xlane.f32.xlu0 %v873
          %v875 = vpop.xlane.xlu0 %874
          %v876 = vsel %vm572, %v864, 0.0
          %877 = vadd.xlane.f32.xlu0 %v876
          %v878 = vpop.xlane.xlu0 %877
          %v879 = vmul.f32 %v869, %v701
          %v880 = vmul.f32 %v872, %v701
          %v881 = vmul.f32 %v875, %v701
          %v882 = vmul.f32 %v878, %v701
          %v883 = vsub.f32 %v849, %v879
          %v884 = vsub.f32 %v854, %v880
          %v885 = vsub.f32 %v859, %v881
          %v886 = vsub.f32 %v864, %v882
          %v887 = vmul.f32 %v883, %v883
          %v888 = vmul.f32 %v884, %v884
          %v889 = vmul.f32 %v885, %v885
          %v890 = vmul.f32 %v886, %v886
          %v891 = vsel %vm572, %v887, 0.0
          %892 = vadd.xlane.f32.xlu0 %v891
          %v893 = vpop.xlane.xlu0 %892
          %v894 = vsel %vm572, %v888, 0.0
          %895 = vadd.xlane.f32.xlu0 %v894
          %v896 = vpop.xlane.xlu0 %895
          %v897 = vsel %vm572, %v889, 0.0
          %898 = vadd.xlane.f32.xlu0 %v897
          %v899 = vpop.xlane.xlu0 %898
          %v900 = vsel %vm572, %v890, 0.0
          %901 = vadd.xlane.f32.xlu0 %v900
          %v902 = vpop.xlane.xlu0 %901
          %v903 = vmul.f32 %v893, %v701
          %v904 = vmul.f32 %v896, %v701
          %v905 = vmul.f32 %v899, %v701
          %v906 = vmul.f32 %v902, %v701
          %v907 = vadd.f32 %v903, 1e-05
          %v908 = vadd.f32 %v904, 1e-05
          %v909 = vadd.f32 %v905, 1e-05
          %v910 = vadd.f32 %v906, 1e-05
          %v911 = vrsqrt.pop %v907
          %v912 = vrsqrt.pop %v908
          %v913 = vrsqrt.pop %v909
          %v914 = vrsqrt.pop %v910
          %v915 = vmul.f32 %v883, %v911
          %v916 = vmul.f32 %v884, %v912
          %v917 = vmul.f32 %v885, %v913
          %v918 = vmul.f32 %v886, %v914
          %v919 = vmax.f32 %v915, 0.0
          %v920 = vmax.f32 %v916, 0.0
          %v921 = vmax.f32 %v917, 0.0
          %v922 = vmax.f32 %v918, 0.0
          %923 = vrot.lane.b32.xlu0 %v548, 96
          %v924 = vpop.permute.xlu0 %923
          %925 = vrot.lane.b32.xlu0 %v549, 96
          %v926 = vpop.permute.xlu0 %925
          %927 = vrot.lane.b32.xlu0 %v550, 96
          %v928 = vpop.permute.xlu0 %927
          %929 = vrot.lane.b32.xlu0 %v551, 96
          %v930 = vpop.permute.xlu0 %929
          %v935 = vadd.f32 %v919, %v924
          %v936 = vadd.f32 %v920, %v926
          %v937 = vadd.f32 %v921, %v928
          %v938 = vadd.f32 %v922, %v930
          %943 = vrot.lane.b32.xlu0 %v935, 32
          %v944 = vpop.permute.xlu0 %943
          %945 = vrot.lane.b32.xlu0 %v936, 32
          %v946 = vpop.permute.xlu0 %945
          %947 = vrot.lane.b32.xlu0 %v937, 32
          %v948 = vpop.permute.xlu0 %947
          %949 = vrot.lane.b32.xlu0 %v938, 32
          %v950 = vpop.permute.xlu0 %949
          %v955 = vsel %vm572, %v746, %v944
          %v956 = vsel %vm572, %v747, %v946
          %v957 = vsel %vm572, %v748, %v948
          %v958 = vsel %vm572, %v749, %v950
          %959 = vst.msk [vmem:[%s367] sm:$0xff] %vm539, %v955
          %960 = vst.msk [vmem:[%s367 + $0x8] sm:$0xff] %vm539, %v956
          %961 = vst.msk [vmem:[%s367 + $0x10] sm:$0xff] %vm539, %v957
          %962 = vst.msk [vmem:[%s367 + $0x18] sm:$0xff] %vm539, %v958
        $region93: #{tpu_custom_call.1} parent=80 // pred_fallthru
          _
        %s963 = sand.u32 %s188, 1
        %s964 = scalar_lea.sflag [#allocation5], %s963
        %s965 = sand.u32 %s188, 1
        %s966 = smul.addr %s965, 32
        %s967 = scalar_lea.vmem [#allocation4], %s966
        // Predicated region
        $region94: #{tpu_custom_call.1} parent=80 // pred_check
          %p968 = pneg %p198
        $region95: #{tpu_custom_call.1} parent=80 // pred_check_branch
          %970 = sbr.rel (%p968) target = $region97
        $region96: #{tpu_custom_call.1} parent=80 // pred_region
          %s971 = smul.u32 4, %s24
          %s973 = ssub.s32 512, 512
          %974 = vsyncadd %s964, %s973
          %s975 = smul.addr %s971, 128
          %s976 = scalar_lea.hbm %s6, %s975
          %s977 = sshll.u32 %s967, 4
          %s978 = int_to_ptr.vmem [resolvable:$true] %s977
          %983 = dma.vmem_to_hbm [thread:$0]  %s978, 512, %s976, %s964, 128, 128, 8
        $region97: #{tpu_custom_call.1} parent=80 // pred_fallthru
          _
      $region81: #{tpu_custom_call.1} parent=5 // pred_fallthru
        _
      %p984 = scmp.le.s32.totalorder 2, %s15
      // Predicated region
      $region98: #{tpu_custom_call.1} parent=5 // pred_check
        %p985 = pneg %p984
      $region99: #{tpu_custom_call.1} parent=5 // pred_check_branch
        %987 = sbr.rel (%p985) target = $region101
      $region100: #{tpu_custom_call.1} parent=5 // pred_region
        %s988 = ssub.s32 %s15, 2
        // Predicated region
        $region102: #{tpu_custom_call.1} parent=100 // pred_check
          %p989 = pneg %p204
        $region103: #{tpu_custom_call.1} parent=100 // pred_check_branch
          %991 = sbr.rel (%p989) target = $region105
        $region104: #{tpu_custom_call.1} parent=100 // pred_region
          %s992 = sand.u32 %s189, 1
          %s993 = scalar_lea.sflag [#allocation5], %s992
          %s994 = sand.u32 %s189, 1
          %s995 = smul.addr %s994, 32
          %s996 = scalar_lea.vmem [#allocation4], %s995
          %997 = dma.done %s993, 512
        $region105: #{tpu_custom_call.1} parent=100 // pred_fallthru
          _
      $region101: #{tpu_custom_call.1} parent=5 // pred_fallthru
        _
    $region6: #{tpu_custom_call.1} parent=1 // loop_footer
      %s19 = sadd.s32 1, %s15
    $region7: #{tpu_custom_call.1} parent=1 // loop_footer_branch
      %14 = sbr.rel target = $region3
    $region8: #{tpu_custom_call.1} parent=1 // loop_exit
      _
    %998 = vsyncpa [#allocation5], 1
    %s999 = scalar_lea.sflag [#allocation5], 1
    %1000 = vsyncpa %s999, 1

</llo_original>
